<compile_context>
chip_gen: v6e
topology: v6e:2x2x1
jax: 0.10.0
libtpu: 0.0.40
codegen_flags: <defaults>
</compile_context>

<pallas_src>
import math

import jax
import jax.numpy as jnp
from jax.experimental import pallas as pl
from jax.experimental.pallas import tpu as pltpu


def _passthrough_kernel(x_ref, o_ref):
    # Pure pass-through: forward() returns x unchanged (just viewed 4D).
    o_ref[...] = x_ref[...]


def _sublane_granularity(dtype):
    """Native sublane packing granularity for the second-to-last block dim."""
    itemsize = jnp.dtype(dtype).itemsize
    return {4: 8, 2: 16, 1: 32}.get(itemsize, 8)


def _pick_row_tile(rows, cols, dtype, tile_budget_bytes=2 * 1024 * 1024):
    """Row tile for a (rows, cols) slab copied with full-extent cols blocks.

    - Accounts for lane padding (cols rounds up to a multiple of 128 in VMEM).
    - Rounds to the dtype-aware sublane granularity.
    - Caps at ~rows/2 so the grid has >= 2 steps whenever rows permit
      (v7x has 2 TensorCores; "parallel" grid axes shard across them).
    - Never requests a block bigger than the VMEM tile budget (copy throughput
      plateaus well below this; bigger tiles buy nothing).
    """
    g = _sublane_granularity(dtype)
    itemsize = jnp.dtype(dtype).itemsize
    cols_padded = pl.cdiv(cols, 128) * 128          # real lane footprint
    row_bytes = cols_padded * itemsize
    cap = max(g, (tile_budget_bytes // row_bytes) // g * g)
    if rows <= g:
        return rows                                  # tiny: one full-extent block
    half = pl.cdiv(pl.cdiv(rows, 2), g) * g          # >= 2 grid steps if possible
    return max(g, min(cap, half))


def mlca_forward(x, *, local_size=5, V=17, use_pallas_copy=True):
    """Replicates MLCA.forward. Returns x viewed as (B, C, T, V).

    local_arv / global_arv are computed and immediately discarded in the
    reference forward; they are dead code and intentionally not computed here.

    use_pallas_copy=False returns the metadata-only reshape (the true optimum:
    zero HBM traffic).  The default keeps a lane-aware, optimally-tiled Pallas
    identity copy so a real kernel is exercised.
    """
    del local_size  # only used by the dead pooling path
    b, c, t_v = x.shape
    assert t_v % V == 0, f"last dim {t_v} must be divisible by V={V}"
    T = t_v // V

    if not use_pallas_copy:
        # Optimal forward: metadata-only reshape, no kernel launch, no copy.
        return x.reshape(b, c, T, V)

    rows, cols = b * c, T * V
    itemsize = jnp.dtype(x.dtype).itemsize
    cols_padded = pl.cdiv(cols, 128) * 128

    # 2D slab (B*C, T*V); last dim is the full extent (legal block dim even
    # though 136 is not a multiple of 128).
    x2 = x.reshape(rows, cols)

    rt = _pick_row_tile(rows, cols, x.dtype)
    grid = (pl.cdiv(rows, rt),)   # partial last block handled by Pallas masking

    # Real double-buffered working set: 2 buffers x (in + out) x padded tile.
    working_set = 2 * 2 * rt * cols_padded * itemsize
    vmem_limit = int(min(64 * 1024 * 1024, max(4 * 1024 * 1024, 2 * working_set)))

    out2 = pl.pallas_call(
        _passthrough_kernel,
        out_shape=jax.ShapeDtypeStruct((rows, cols), x.dtype),
        grid_spec=pltpu.PrefetchScalarGridSpec(
            num_scalar_prefetch=0,
            grid=grid,
            in_specs=[pl.BlockSpec((rt, cols), lambda i: (i, 0))],
            out_specs=pl.BlockSpec((rt, cols), lambda i: (i, 0)),
        ),
        compiler_params=pltpu.CompilerParams(
            dimension_semantics=("parallel",),
            vmem_limit_bytes=vmem_limit,
        ),
        cost_estimate=pl.CostEstimate(
            flops=0,
            transcendentals=0,
            bytes_accessed=2 * rows * cols * itemsize,
        ),
    )(x2)

    return out2.reshape(b, c, T, V)


def make_mlca_params(in_size, gamma=2, b_param=1, key=jax.random.PRNGKey(0)):
    """Deterministic init of the (unused-in-forward) Conv1d weights."""
    t = int(abs(math.log(in_size, 2) + b_param) / gamma)
    k = t if t % 2 else t + 1
    k1, k2 = jax.random.split(key)
    bound = 1.0 / math.sqrt(k)  # matches torch Conv1d kaiming-uniform fan_in=k
    conv_w = jax.random.uniform(k1, (1, 1, k), jnp.float32, -bound, bound)
    conv_local_w = jax.random.uniform(k2, (1, 1, k), jnp.float32, -bound, bound)
    # TODO(synk): conv / conv_local / local_weight and the adaptive-average
    # pools never contribute to MLCA.forward's return value; the weights are
    # initialized for completeness but intentionally not applied.
    return {"conv_w": conv_w, "conv_local_w": conv_local_w, "kernel_size": k}


if __name__ == "__main__":
    key = jax.random.PRNGKey(0)

    B, C, T, V = 2, 4, 8, 17          # small shapes; t_v = T * 17 = 136
    x = jax.random.normal(key, (B, C, T * V), dtype=jnp.float32)

    params = make_mlca_params(in_size=C)  # deterministic, unused in forward

    # Pallas-copy path (exercises the kernel).
    out = mlca_forward(x, local_size=5, V=V)
    out = jax.block_until_ready(out)

    assert out.shape == (B, C, T, V)
    assert out.dtype == x.dtype
    assert bool(jnp.allclose(out, x.reshape(B, C, T, V)))

    # Metadata-only fast path (the true optimum) must agree.
    out_fast = mlca_forward(x, local_size=5, V=V, use_pallas_copy=False)
    out_fast = jax.block_until_ready(out_fast)
    assert bool(jnp.allclose(out_fast, out))

    print("KERNEL_OK")
</pallas_src>

<mosaic_0001>
module attributes {stable_mosaic.version = 11 : i64} {
  func.func @_passthrough_kernel(%arg0: i32, %arg1: memref<8x136xf32, #tpu.memory_space<vmem>>, %arg2: memref<8x136xf32, #tpu.memory_space<vmem>>) attributes {dimension_semantics = [#tpu.dimension_semantics<parallel>], iteration_bounds = array<i64: 1>, scalar_prefetch = 0 : i64, scratch_operands = 0 : i64, tpu.core_type = #tpu.core_type<tc>, window_params = [{transform_indices = @transform_0, window_bounds = array<i64: 8, 136>}, {transform_indices = @transform_1, window_bounds = array<i64: 8, 136>}]} {
    %c0 = arith.constant 0 : index
    %c0_0 = arith.constant 0 : index
    %0 = vector.load %arg1[%c0, %c0_0] : memref<8x136xf32, #tpu.memory_space<vmem>>, vector<8x136xf32>
    %c0_1 = arith.constant 0 : index
    %c0_2 = arith.constant 0 : index
    %1 = vector.load %arg2[%c0_1, %c0_2] : memref<8x136xf32, #tpu.memory_space<vmem>>, vector<8x136xf32>
    tpu.vector_store %arg2[%c0_1, %c0_2], %0 {strides = array<i32>} : memref<8x136xf32, #tpu.memory_space<vmem>>, vector<8x136xf32>,
    return
  }
  func.func @transform_0(%arg0: i32) -> (i32, i32) {
    %c0_i32 = arith.constant 0 : i32
    %c0_i32_0 = arith.constant 0 : i32
    return %arg0, %c0_i32 : i32, i32
  }
  func.func @transform_1(%arg0: i32) -> (i32, i32) {
    %c0_i32 = arith.constant 0 : i32
    %c0_i32_0 = arith.constant 0 : i32
    return %arg0, %c0_i32 : i32, i32
  }
}

</mosaic_0001>

<llo_original>
// kernel: tpu_custom_call.1
$region0: #{tpu_custom_call.1}
  #allocation0 [shape = 'u32[]', space=smem, size = 0x4, offset = 0x4, fixed_abs, tag = 'smem constant byte address 0x4 - core index']
  #allocation1 [shape = 'u32[144,128]{1,0:T(1,128)}', space=vmem, size = 0x12000, scoped, tag = 'internal scratch']
  %s0 = inlined_call_operand.hbm [shape: f32[8,136], index: 0, kind: input, shape index: {}]
  %s1 = inlined_call_operand.hbm [shape: f32[8,136], index: 1, kind: output, shape index: {}]
  %s2 = sld [smem:[#allocation0]]
  $region18: #{tpu_custom_call.1} parent=0
    _
  %s4 = ssub.s32 1, %s2
  %s5 = scalar_select 0, %s4, %s2
  $region1: #{tpu_custom_call.1} parent=0
    #allocation2 [shape = 'u8[8192]{0}', space=vmem, size = 0x2000, scoped, tag = 'input window, operand 0, single buffered']
    #allocation3 [shape = 's32[1]{0}', space=sflag, size = 0x4, scoped, tag = 'scoped memory for tpu_custom_call.1']
    #allocation4 [shape = 's32[1]{0}', space=sflag, size = 0x4, scoped, tag = 'scoped memory for tpu_custom_call.1']
    #allocation5 [shape = 'u8[8192]{0}', space=vmem, size = 0x2000, scoped, tag = 'output window, operand 0, single buffered']
    %6 = vsyncpa [#allocation3], 0
    %7 = vsyncpa [#allocation4], 0
    // Predicated region
    $region2: #{tpu_custom_call.1} parent=1 // pred_check
      _
    $region3: #{tpu_custom_call.1} parent=1 // pred_check_branch
      %9 = sbr.rel (0) target = $region5
    $region4: #{tpu_custom_call.1} parent=1 // pred_region
      %s11 = ssub.s32 256, 256
      %12 = vsyncadd [#allocation3], %s11
      %s14 = sshll.u32 [#allocation2], 4
      %s15 = int_to_ptr.vmem [resolvable:$true] %s14
      %17 = dma.hbm_to_vmem [thread:$0]  %s0, 256, %s15, [#allocation3]
    $region5: #{tpu_custom_call.1} parent=1 // pred_fallthru
      _
    // Predicated region
    $region6: #{tpu_custom_call.1} parent=1 // pred_check
      _
    $region7: #{tpu_custom_call.1} parent=1 // pred_check_branch
      %19 = sbr.rel (0) target = $region9
    $region8: #{tpu_custom_call.1} parent=1 // pred_region
      %20 = dma.done [#allocation3], 256
    $region9: #{tpu_custom_call.1} parent=1 // pred_fallthru
      _
    %v21 = vld [vmem:[#allocation2] sm:$0xff]
    %v22 = vld [vmem:[#allocation2 + $0x8] sm:$0xff]
    %23 = vst [vmem:[#allocation5] sm:$0xff] %v21
    %vm24 = vcmask 64512
    %25 = vst.msk [vmem:[#allocation5 + $0x8] sm:$0xff] %vm24, %v22
    // Predicated region
    $region10: #{tpu_custom_call.1} parent=1 // pred_check
      _
    $region11: #{tpu_custom_call.1} parent=1 // pred_check_branch
      %27 = sbr.rel (0) target = $region13
    $region12: #{tpu_custom_call.1} parent=1 // pred_region
      %s29 = ssub.s32 256, 256
      %30 = vsyncadd [#allocation4], %s29
      %s32 = sshll.u32 [#allocation5], 4
      %s33 = int_to_ptr.vmem [resolvable:$true] %s32
      %35 = dma.vmem_to_hbm [thread:$0]  %s33, 256, %s1, [#allocation4]
    $region13: #{tpu_custom_call.1} parent=1 // pred_fallthru
      _
    // Predicated region
    $region14: #{tpu_custom_call.1} parent=1 // pred_check
      _
    $region15: #{tpu_custom_call.1} parent=1 // pred_check_branch
      %37 = sbr.rel (0) target = $region17
    $region16: #{tpu_custom_call.1} parent=1 // pred_region
      %38 = dma.done [#allocation4], 256
    $region17: #{tpu_custom_call.1} parent=1 // pred_fallthru
      _
    %39 = vsyncpa [#allocation3], 1
    %40 = vsyncpa [#allocation4], 1

</llo_original>
